<compile_context>
chip_gen: v6e
topology: v6e:2x2x1
jax: 0.10.0
libtpu: 0.0.40
codegen_flags: <defaults>
</compile_context>

<pallas_src>
import functools

import jax
import jax.numpy as jnp
from jax.experimental import pallas as pl
from jax.experimental.pallas import tpu as pltpu


def _rup(n, m):
    return ((n + m - 1) // m) * m


def _pad2(x, rows, cols, value=0.0):
    pr, pc = rows - x.shape[0], cols - x.shape[1]
    if pr == 0 and pc == 0:
        return x
    return jnp.pad(x, ((0, pr), (0, pc)), constant_values=value)


# ----------------------------------------------------------------------------
# Kernel: one batch tile per grid step; weights/biases are resident.
# ----------------------------------------------------------------------------
def _boltzman_kernel(
    obs_ref,   # (TB, D)    bf16
    q_ref,     # (TB, A)    f32
    w0_ref,    # (D,  Hp)   bf16   feature net layer 0
    b0_ref,    # (1,  Hp)   f32
    w1_ref,    # (Hp, Fp)   bf16   feature net layer 1
    b1_ref,    # (1,  Fp)   f32
    wt0_ref,   # (Fp, Htp)  bf16   temp net hidden layer
    bt0_ref,   # (1,  Htp)  f32
    wt1_ref,   # (1,  Htp)  f32    temp net output column (stored as a row)
    bt1_ref,   # (1,)       f32    scalar temperature bias (SMEM)
    out_ref,   # (TB, A)    f32
):
    bf16 = jnp.bfloat16

    # ---- feature_net: 2-layer MLP with ReLU activations (bf16 MXU, f32 acc) ----
    h0 = jnp.dot(obs_ref[...], w0_ref[...],
                 preferred_element_type=jnp.float32) + b0_ref[...]
    h0 = jnp.maximum(h0, 0.0)
    feats = jnp.dot(h0.astype(bf16), w1_ref[...],
                    preferred_element_type=jnp.float32) + b1_ref[...]
    feats = jnp.maximum(feats, 0.0)

    # ---- temp_net hidden layer ----
    t0 = jnp.dot(feats.astype(bf16), wt0_ref[...],
                 preferred_element_type=jnp.float32) + bt0_ref[...]
    t0 = jnp.maximum(t0, 0.0)

    # ---- temperature head: (TB,Ht) x (Ht,1) as VPU mul + lane reduce
    # (an N=1 MXU matmul wastes a whole systolic pass + result-FIFO drain).
    temperature = jnp.sum(t0 * wt1_ref[...], axis=-1, keepdims=True) + bt1_ref[0]
    # NOTE: like the PyTorch reference, temperature is a raw linear output and
    # may be <= 0 (inf/NaN downstream); kept identical to the spec.
    inv_t = pl.reciprocal(temperature, approx=True)    # single EUP op

    # ---- scaled Q + softmax over the (native-width) action axis ----
    scaled = q_ref[...] * inv_t                        # (TB, A)
    m = jnp.max(scaled, axis=-1, keepdims=True)
    e = jnp.exp(scaled - m)
    denom = jnp.sum(e, axis=-1, keepdims=True)
    out_ref[...] = e * pl.reciprocal(denom, approx=True)


# ----------------------------------------------------------------------------
# Parameter preparation (done once at init): pad only weight OUTPUT dims to a
# lane-friendly 128 (zero padding keeps the math exact) and cast matmul
# weights to bf16.  Contraction dims stay native so the activation streams
# need no padding at all.
# ----------------------------------------------------------------------------
def prepare_params(params):
    w0, b0, w1, b1, wt0, bt0, wt1, bt1 = params
    d, h = w0.shape
    f = w1.shape[1]
    ht = wt0.shape[1]
    hp, fp, htp = (_rup(x, 128) for x in (h, f, ht))
    return (
        _pad2(w0, d, hp).astype(jnp.bfloat16),      # (D,  Hp)
        _pad2(b0, 1, hp).astype(jnp.float32),       # (1,  Hp)
        _pad2(w1, hp, fp).astype(jnp.bfloat16),     # (Hp, Fp)
        _pad2(b1, 1, fp).astype(jnp.float32),       # (1,  Fp)
        _pad2(wt0, fp, htp).astype(jnp.bfloat16),   # (Fp, Htp)
        _pad2(bt0, 1, htp).astype(jnp.float32),     # (1,  Htp)
        _pad2(wt1.T, 1, htp).astype(jnp.float32),   # (1,  Htp) row for VPU reduce
        bt1.reshape(-1).astype(jnp.float32),        # (1,) scalar -> SMEM
    )


@functools.partial(jax.jit, static_argnames=("batch_tile",))
def trainable_boltzman_sampler(obs, q_values, prepared, *, batch_tile=1024):
    """Returns (action_probs_BA, hidden).  hidden is None (feed-forward net)."""
    w0, b0, w1, b1, wt0, bt0, wt1, bt1 = prepared
    B, A = q_values.shape
    D, Hp = w0.shape
    Fp = w1.shape[1]
    Htp = wt0.shape[1]

    # Batch tile:
    #  * tiny batches: one full-array block (no ragged handling at all);
    #  * large batches: multiple of 16 sublanes (bf16 obs packing), capped at
    #    batch_tile, and capped at ~B/2 so v7x's two TensorCores both get work.
    if B <= 16:
        TB = B
    else:
        TB = min(batch_tile, max(_rup(-(-B // 2), 16), 16))
    grid = (pl.cdiv(B, TB),)

    # obs is consumed in bf16 by the first matmul -> ship it as bf16 (halves
    # the obs HBM stream).  No pad / slice passes anywhere: native B, D, A.
    obs_bf = obs.astype(jnp.bfloat16)
    q_f32 = q_values.astype(jnp.float32)

    # VMEM budget: double-buffered batch tiles + resident weights + headroom for
    # the (TB, 128) f32 intermediate activations.  Capped at 32 MiB so it is
    # safe on v7x (64 MiB physical VMEM); v5e/v6e (128 MiB) can raise this
    # together with batch_tile.
    stream_bytes = TB * (D * 2 + 2 * A * 4)
    weight_bytes = (D * Hp + Hp * Fp + Fp * Htp) * 2 + (Hp + Fp + 2 * Htp) * 4
    act_bytes = 6 * TB * max(Hp, Fp, Htp) * 4
    vmem_limit = int(min(max(2 * stream_bytes + weight_bytes + act_bytes + (2 << 20),
                             16 << 20), 32 << 20))

    cost = pl.CostEstimate(
        flops=2 * B * (D * Hp + Hp * Fp + Fp * Htp + Htp),
        transcendentals=B * (A + 2),
        bytes_accessed=int(B * D * 2 + 2 * B * A * 4 + weight_bytes + 4),
    )

    full = lambda arr: pl.BlockSpec(arr.shape, lambda i: (0, 0))
    out = pl.pallas_call(
        _boltzman_kernel,
        grid=grid,
        out_shape=jax.ShapeDtypeStruct((B, A), jnp.float32),
        in_specs=[
            pl.BlockSpec((TB, D), lambda i: (i, 0)),             # obs tile (bf16)
            pl.BlockSpec((TB, A), lambda i: (i, 0)),             # q tile (f32)
            full(w0), full(b0), full(w1), full(b1),
            full(wt0), full(bt0), full(wt1),
            pl.BlockSpec(memory_space=pltpu.MemorySpace.SMEM),   # bt1 scalar
        ],
        out_specs=pl.BlockSpec((TB, A), lambda i: (i, 0)),
        compiler_params=pltpu.CompilerParams(
            dimension_semantics=("parallel",),
            vmem_limit_bytes=vmem_limit,
        ),
        cost_estimate=cost,
    )(obs_bf, q_f32, w0, b0, w1, b1, wt0, bt0, wt1, bt1)

    # TODO(synk): hidden_BH is only non-None for recurrent feature nets; this
    # feed-forward MLP feature net always returns None.
    return out, None


# ----------------------------------------------------------------------------
# Deterministic parameter construction and pure-JAX reference.
# ----------------------------------------------------------------------------
def make_params(key, d_obs, h_feat, f_out, h_temp):
    ks = jax.random.split(key, 4)
    scale = 0.05
    w0 = scale * jax.random.normal(ks[0], (d_obs, h_feat), jnp.float32)
    b0 = jnp.zeros((1, h_feat), jnp.float32)
    w1 = scale * jax.random.normal(ks[1], (h_feat, f_out), jnp.float32)
    b1 = jnp.zeros((1, f_out), jnp.float32)
    wt0 = scale * jax.random.normal(ks[2], (f_out, h_temp), jnp.float32)
    bt0 = jnp.zeros((1, h_temp), jnp.float32)
    wt1 = scale * jax.random.normal(ks[3], (h_temp, 1), jnp.float32)
    bt1 = jnp.ones((1, 1), jnp.float32)  # keep the (untrained) temperature near 1
    return (w0, b0, w1, b1, wt0, bt0, wt1, bt1)


def reference_forward(obs, q_values, params):
    """Pure-JAX reference using the same bf16-matmul / f32-accumulate recipe."""
    w0, b0, w1, b1, wt0, bt0, wt1, bt1 = params
    bf = jnp.bfloat16
    dot = lambda a, b: jnp.dot(a.astype(bf), b.astype(bf),
                               preferred_element_type=jnp.float32)
    h0 = jnp.maximum(dot(obs, w0) + b0, 0.0)
    feats = jnp.maximum(dot(h0, w1) + b1, 0.0)
    t0 = jnp.maximum(dot(feats, wt0) + bt0, 0.0)
    temp = t0 @ wt1 + bt1
    return jax.nn.softmax(q_values / temp, axis=-1)


if __name__ == "__main__":
    # Small shapes consistent with the module's forward:
    #   obs: (B, D_obs); state (q_values): (B, A) with A == action_shape.
    B, D_OBS, H_FEAT, F_OUT, H_TEMP, A = 2, 16, 32, 32, 32, 8

    key = jax.random.PRNGKey(0)
    k_obs, k_q, k_p = jax.random.split(key, 3)

    obs = jax.random.normal(k_obs, (B, D_OBS), jnp.float32)
    q_values = jax.random.normal(k_q, (B, A), jnp.float32)  # the `state` argument
    params = make_params(k_p, D_OBS, H_FEAT, F_OUT, H_TEMP)
    prepared = prepare_params(params)

    probs, hidden = trainable_boltzman_sampler(obs, q_values, prepared)
    probs = jax.block_until_ready(probs)

    ref = reference_forward(obs, q_values, params)
    assert probs.shape == (B, A)
    assert hidden is None
    # bf16 matmuls + approx reciprocals (temperature & softmax denom) => ~1e-3 tol.
    assert jnp.allclose(probs, ref, atol=2e-3, rtol=2e-3)
    assert jnp.allclose(jnp.sum(probs, axis=-1), 1.0, atol=2e-3)

    print("KERNEL_OK")
</pallas_src>

<mosaic_0001>
module attributes {stable_mosaic.version = 11 : i64} {
  func.func @_boltzman_kernel(%arg0: i32, %arg1: memref<2x16xbf16, #tpu.memory_space<vmem>>, %arg2: memref<2x8xf32, #tpu.memory_space<vmem>>, %arg3: memref<16x128xbf16, #tpu.memory_space<vmem>>, %arg4: memref<1x128xf32, #tpu.memory_space<vmem>>, %arg5: memref<128x128xbf16, #tpu.memory_space<vmem>>, %arg6: memref<1x128xf32, #tpu.memory_space<vmem>>, %arg7: memref<128x128xbf16, #tpu.memory_space<vmem>>, %arg8: memref<1x128xf32, #tpu.memory_space<vmem>>, %arg9: memref<1x128xf32, #tpu.memory_space<vmem>>, %arg10: memref<1xf32, #tpu.memory_space<smem>>, %arg11: memref<2x8xf32, #tpu.memory_space<vmem>>) attributes {dimension_semantics = [#tpu.dimension_semantics<parallel>], iteration_bounds = array<i64: 1>, scalar_prefetch = 0 : i64, scratch_operands = 0 : i64, tpu.core_type = #tpu.core_type<tc>, window_params = [{transform_indices = @transform_0, window_bounds = array<i64: 2, 16>}, {transform_indices = @transform_1, window_bounds = array<i64: 2, 8>}, {pipeline_mode = #tpu.pipeline_mode<synchronous>, transform_indices = @transform_2, window_bounds = array<i64: 16, 128>}, {pipeline_mode = #tpu.pipeline_mode<synchronous>, transform_indices = @transform_3, window_bounds = array<i64: 1, 128>}, {pipeline_mode = #tpu.pipeline_mode<synchronous>, transform_indices = @transform_4, window_bounds = array<i64: 128, 128>}, {pipeline_mode = #tpu.pipeline_mode<synchronous>, transform_indices = @transform_5, window_bounds = array<i64: 1, 128>}, {pipeline_mode = #tpu.pipeline_mode<synchronous>, transform_indices = @transform_6, window_bounds = array<i64: 128, 128>}, {pipeline_mode = #tpu.pipeline_mode<synchronous>, transform_indices = @transform_7, window_bounds = array<i64: 1, 128>}, {pipeline_mode = #tpu.pipeline_mode<synchronous>, transform_indices = @transform_8, window_bounds = array<i64: 1, 128>}, {transform_indices = @transform_9, window_bounds = array<i64: 1>}, {transform_indices = @transform_10, window_bounds = array<i64: 2, 8>}]} {
    %c0 = arith.constant 0 : index
    %c0_0 = arith.constant 0 : index
    %0 = vector.load %arg1[%c0, %c0_0] : memref<2x16xbf16, #tpu.memory_space<vmem>>, vector<2x16xbf16>
    %c0_1 = arith.constant 0 : index
    %c0_2 = arith.constant 0 : index
    %1 = vector.load %arg3[%c0_1, %c0_2] : memref<16x128xbf16, #tpu.memory_space<vmem>>, vector<16x128xbf16>
    %cst = arith.constant dense<0.000000e+00> : vector<2x128xf32>
    %2 = tpu.matmul %0, %1, %cst {dimension_numbers = #tpu.dot_dimension_numbers<[1], [0], [0], [1], [0, 0, 1, 1], [], []>} : vector<2x16xbf16>, vector<16x128xbf16>, vector<2x128xf32> -> vector<2x128xf32>
    %c0_3 = arith.constant 0 : index
    %c0_4 = arith.constant 0 : index
    %3 = vector.load %arg4[%c0_3, %c0_4] : memref<1x128xf32, #tpu.memory_space<vmem>>, vector<1x128xf32>
    %4 = vector.broadcast %3 : vector<1x128xf32> to vector<2x128xf32>
    %5 = arith.addf %2, %4 : vector<2x128xf32>
    %cst_5 = arith.constant 0.000000e+00 : f32
    %6 = vector.broadcast %cst_5 : f32 to vector<2x128xf32>
    %7 = arith.maximumf %5, %6 : vector<2x128xf32>
    %8 = arith.truncf %7 : vector<2x128xf32> to vector<2x128xbf16>
    %c0_6 = arith.constant 0 : index
    %c0_7 = arith.constant 0 : index
    %9 = vector.load %arg5[%c0_6, %c0_7] : memref<128x128xbf16, #tpu.memory_space<vmem>>, vector<128x128xbf16>
    %cst_8 = arith.constant dense<0.000000e+00> : vector<2x128xf32>
    %10 = tpu.matmul %8, %9, %cst_8 {dimension_numbers = #tpu.dot_dimension_numbers<[1], [0], [0], [1], [0, 0, 1, 1], [], []>} : vector<2x128xbf16>, vector<128x128xbf16>, vector<2x128xf32> -> vector<2x128xf32>
    %c0_9 = arith.constant 0 : index
    %c0_10 = arith.constant 0 : index
    %11 = vector.load %arg6[%c0_9, %c0_10] : memref<1x128xf32, #tpu.memory_space<vmem>>, vector<1x128xf32>
    %12 = vector.broadcast %11 : vector<1x128xf32> to vector<2x128xf32>
    %13 = arith.addf %10, %12 : vector<2x128xf32>
    %cst_11 = arith.constant 0.000000e+00 : f32
    %14 = vector.broadcast %cst_11 : f32 to vector<2x128xf32>
    %15 = arith.maximumf %13, %14 : vector<2x128xf32>
    %16 = arith.truncf %15 : vector<2x128xf32> to vector<2x128xbf16>
    %c0_12 = arith.constant 0 : index
    %c0_13 = arith.constant 0 : index
    %17 = vector.load %arg7[%c0_12, %c0_13] : memref<128x128xbf16, #tpu.memory_space<vmem>>, vector<128x128xbf16>
    %cst_14 = arith.constant dense<0.000000e+00> : vector<2x128xf32>
    %18 = tpu.matmul %16, %17, %cst_14 {dimension_numbers = #tpu.dot_dimension_numbers<[1], [0], [0], [1], [0, 0, 1, 1], [], []>} : vector<2x128xbf16>, vector<128x128xbf16>, vector<2x128xf32> -> vector<2x128xf32>
    %c0_15 = arith.constant 0 : index
    %c0_16 = arith.constant 0 : index
    %19 = vector.load %arg8[%c0_15, %c0_16] : memref<1x128xf32, #tpu.memory_space<vmem>>, vector<1x128xf32>
    %20 = vector.broadcast %19 : vector<1x128xf32> to vector<2x128xf32>
    %21 = arith.addf %18, %20 : vector<2x128xf32>
    %cst_17 = arith.constant 0.000000e+00 : f32
    %22 = vector.broadcast %cst_17 : f32 to vector<2x128xf32>
    %23 = arith.maximumf %21, %22 : vector<2x128xf32>
    %c0_18 = arith.constant 0 : index
    %c0_19 = arith.constant 0 : index
    %24 = vector.load %arg9[%c0_18, %c0_19] : memref<1x128xf32, #tpu.memory_space<vmem>>, vector<1x128xf32>
    %25 = vector.broadcast %24 : vector<1x128xf32> to vector<2x128xf32>
    %26 = arith.mulf %23, %25 : vector<2x128xf32>
    %cst_20 = arith.constant dense<0.000000e+00> : vector<2xf32>
    %27 = vector.multi_reduction <add>, %26, %cst_20 [1] : vector<2x128xf32> to vector<2xf32>
    %28 = vector.shape_cast %27 : vector<2xf32> to vector<2x1xf32>
    %c0_21 = arith.constant 0 : index
    %29 = memref.load %arg10[%c0_21] : memref<1xf32, #tpu.memory_space<smem>>
    %30 = vector.broadcast %29 : f32 to vector<2x1xf32>
    %31 = arith.addf %28, %30 : vector<2x1xf32>
    %32 = tpu.reciprocal %31 {approx = true} : vector<2x1xf32> -> vector<2x1xf32>
    %c0_22 = arith.constant 0 : index
    %c0_23 = arith.constant 0 : index
    %33 = vector.load %arg2[%c0_22, %c0_23] : memref<2x8xf32, #tpu.memory_space<vmem>>, vector<2x8xf32>
    %34 = vector.broadcast %32 : vector<2x1xf32> to vector<2x8xf32>
    %35 = arith.mulf %33, %34 : vector<2x8xf32>
    %cst_24 = arith.constant dense<0xFF800000> : vector<2xf32>
    %36 = vector.multi_reduction <maximumf>, %35, %cst_24 [1] : vector<2x8xf32> to vector<2xf32>
    %37 = vector.shape_cast %36 : vector<2xf32> to vector<2x1xf32>
    %38 = vector.broadcast %37 : vector<2x1xf32> to vector<2x8xf32>
    %39 = arith.subf %35, %38 : vector<2x8xf32>
    %40 = math.exp %39 : vector<2x8xf32>
    %cst_25 = arith.constant dense<0.000000e+00> : vector<2xf32>
    %41 = vector.multi_reduction <add>, %40, %cst_25 [1] : vector<2x8xf32> to vector<2xf32>
    %42 = vector.shape_cast %41 : vector<2xf32> to vector<2x1xf32>
    %43 = tpu.reciprocal %42 {approx = true} : vector<2x1xf32> -> vector<2x1xf32>
    %44 = vector.broadcast %43 : vector<2x1xf32> to vector<2x8xf32>
    %45 = arith.mulf %40, %44 : vector<2x8xf32>
    %c0_26 = arith.constant 0 : index
    %c0_27 = arith.constant 0 : index
    %46 = vector.load %arg11[%c0_26, %c0_27] : memref<2x8xf32, #tpu.memory_space<vmem>>, vector<2x8xf32>
    tpu.vector_store %arg11[%c0_26, %c0_27], %45 {strides = array<i32>} : memref<2x8xf32, #tpu.memory_space<vmem>>, vector<2x8xf32>,
    return
  }
  func.func @transform_0(%arg0: i32) -> (i32, i32) {
    %c0_i32 = arith.constant 0 : i32
    %c0_i32_0 = arith.constant 0 : i32
    return %arg0, %c0_i32 : i32, i32
  }
  func.func @transform_1(%arg0: i32) -> (i32, i32) {
    %c0_i32 = arith.constant 0 : i32
    %c0_i32_0 = arith.constant 0 : i32
    return %arg0, %c0_i32 : i32, i32
  }
  func.func @transform_2(%arg0: i32) -> (i32, i32) {
    %c0_i32 = arith.constant 0 : i32
    %c0_i32_0 = arith.constant 0 : i32
    %c0_i32_1 = arith.constant 0 : i32
    return %c0_i32, %c0_i32_0 : i32, i32
  }
  func.func @transform_3(%arg0: i32) -> (i32, i32) {
    %c0_i32 = arith.constant 0 : i32
    %c0_i32_0 = arith.constant 0 : i32
    %c0_i32_1 = arith.constant 0 : i32
    return %c0_i32, %c0_i32_0 : i32, i32
  }
  func.func @transform_4(%arg0: i32) -> (i32, i32) {
    %c0_i32 = arith.constant 0 : i32
    %c0_i32_0 = arith.constant 0 : i32
    %c0_i32_1 = arith.constant 0 : i32
    return %c0_i32, %c0_i32_0 : i32, i32
  }
  func.func @transform_5(%arg0: i32) -> (i32, i32) {
    %c0_i32 = arith.constant 0 : i32
    %c0_i32_0 = arith.constant 0 : i32
    %c0_i32_1 = arith.constant 0 : i32
    return %c0_i32, %c0_i32_0 : i32, i32
  }
  func.func @transform_6(%arg0: i32) -> (i32, i32) {
    %c0_i32 = arith.constant 0 : i32
    %c0_i32_0 = arith.constant 0 : i32
    %c0_i32_1 = arith.constant 0 : i32
    return %c0_i32, %c0_i32_0 : i32, i32
  }
  func.func @transform_7(%arg0: i32) -> (i32, i32) {
    %c0_i32 = arith.constant 0 : i32
    %c0_i32_0 = arith.constant 0 : i32
    %c0_i32_1 = arith.constant 0 : i32
    return %c0_i32, %c0_i32_0 : i32, i32
  }
  func.func @transform_8(%arg0: i32) -> (i32, i32) {
    %c0_i32 = arith.constant 0 : i32
    %c0_i32_0 = arith.constant 0 : i32
    %c0_i32_1 = arith.constant 0 : i32
    return %c0_i32, %c0_i32_0 : i32, i32
  }
  func.func @transform_9(%arg0: i32) -> i32 {
    %c0_i32 = arith.constant 0 : i32
    %c0_i32_0 = arith.constant 0 : i32
    return %c0_i32 : i32
  }
  func.func @transform_10(%arg0: i32) -> (i32, i32) {
    %c0_i32 = arith.constant 0 : i32
    %c0_i32_0 = arith.constant 0 : i32
    return %arg0, %c0_i32 : i32, i32
  }
}

</mosaic_0001>

<llo_original>
// kernel: trainable_boltzman_sampler.1
$region0: #{trainable_boltzman_sampler.1}
  #allocation0 [shape = 'u32[]', space=smem, size = 0x4, offset = 0x4, fixed_abs, tag = 'smem constant byte address 0x4 - core index']
  #allocation1 [shape = 'u32[144,128]{1,0:T(1,128)}', space=vmem, size = 0x12000, scoped, tag = 'internal scratch']
  #allocation2 [shape = 'f32[1]{0:T(128)S(6)}', space=smem, size = 0x200, scoped, tag = 'scoped memory for trainable_boltzman_sampler.1']
  %s0 = inlined_call_operand.vmem [shape: bf16[2,16], index: 0, kind: input, shape index: {}]
  %s1 = inlined_call_operand.hbm [shape: f32[2,8], index: 1, kind: input, shape index: {}]
  %s2 = inlined_call_operand.vmem [shape: bf16[16,128], index: 2, kind: input, shape index: {}]
  %s3 = inlined_call_operand.vmem [shape: f32[1,128], index: 3, kind: input, shape index: {}]
  %s4 = inlined_call_operand.hbm [shape: bf16[128,128], index: 4, kind: input, shape index: {}]
  %s5 = inlined_call_operand.vmem [shape: f32[1,128], index: 5, kind: input, shape index: {}]
  %s6 = inlined_call_operand.hbm [shape: bf16[128,128], index: 6, kind: input, shape index: {}]
  %s7 = inlined_call_operand.vmem [shape: f32[1,128], index: 7, kind: input, shape index: {}]
  %s8 = inlined_call_operand.vmem [shape: f32[1,128], index: 8, kind: input, shape index: {}]
  %s9 = inlined_call_operand.<no memory space> [shape: f32[1], index: 9, kind: input, shape index: {}]
  %s10 = inlined_call_operand.hbm [shape: f32[2,8], index: 10, kind: output, shape index: {}]
  %s11 = sld [smem:[#allocation0]]
  $region62: #{trainable_boltzman_sampler.1} parent=0
    _
  %s13 = ssub.s32 1, %s11
  %s14 = scalar_select 0, %s13, %s11
  %15 = sst [smem:[#allocation2]] %s9
  $region1: #{trainable_boltzman_sampler.1} parent=0
    #allocation3 [shape = 'u8[1024]{0}', space=vmem, size = 0x400, scoped, tag = 'input window, operand 1, single buffered']
    #allocation4 [shape = 's32[1]{0}', space=sflag, size = 0x4, scoped, tag = 'scoped memory for trainable_boltzman_sampler.1']
    #allocation5 [shape = 's32[1]{0}', space=sflag, size = 0x4, scoped, tag = 'scoped memory for trainable_boltzman_sampler.1']
    #allocation6 [shape = 'u8[32768]{0}', space=vmem, size = 0x8000, scoped, tag = 'input window, operand 4, single buffered']
    #allocation7 [shape = 's32[1]{0}', space=sflag, size = 0x4, scoped, tag = 'scoped memory for trainable_boltzman_sampler.1']
    #allocation8 [shape = 'u8[32768]{0}', space=vmem, size = 0x8000, scoped, tag = 'input window, operand 6, single buffered']
    #allocation9 [shape = 'u8[1024]{0}', space=vmem, size = 0x400, scoped, tag = 'output window, operand 0, single buffered']
    %16 = vsyncpa [#allocation4], 0
    %17 = vsyncpa [#allocation7], 0
    %18 = vsyncpa [#allocation5], 0
    // Predicated region
    $region2: #{trainable_boltzman_sampler.1} parent=1 // pred_check
      _
    $region3: #{trainable_boltzman_sampler.1} parent=1 // pred_check_branch
      %20 = sbr.rel (0) target = $region5
    $region4: #{trainable_boltzman_sampler.1} parent=1 // pred_region
      _
    $region5: #{trainable_boltzman_sampler.1} parent=1 // pred_fallthru
      _
    // Predicated region
    $region6: #{trainable_boltzman_sampler.1} parent=1 // pred_check
      _
    $region7: #{trainable_boltzman_sampler.1} parent=1 // pred_check_branch
      %22 = sbr.rel (0) target = $region9
    $region8: #{trainable_boltzman_sampler.1} parent=1 // pred_region
      %s24 = ssub.s32 32, 32
      %25 = vsyncadd [#allocation4], %s24
      %s27 = sshll.u32 [#allocation3], 4
      %s28 = int_to_ptr.vmem [resolvable:$true] %s27
      %30 = dma.hbm_to_vmem [thread:$0]  %s1, 32, %s28, [#allocation4]
    $region9: #{trainable_boltzman_sampler.1} parent=1 // pred_fallthru
      _
    // Predicated region
    $region10: #{trainable_boltzman_sampler.1} parent=1 // pred_check
      _
    $region11: #{trainable_boltzman_sampler.1} parent=1 // pred_check_branch
      %32 = sbr.rel (0) target = $region13
    $region12: #{trainable_boltzman_sampler.1} parent=1 // pred_region
      _
    $region13: #{trainable_boltzman_sampler.1} parent=1 // pred_fallthru
      _
    // Predicated region
    $region14: #{trainable_boltzman_sampler.1} parent=1 // pred_check
      _
    $region15: #{trainable_boltzman_sampler.1} parent=1 // pred_check_branch
      %34 = sbr.rel (0) target = $region17
    $region16: #{trainable_boltzman_sampler.1} parent=1 // pred_region
      _
    $region17: #{trainable_boltzman_sampler.1} parent=1 // pred_fallthru
      _
    // Predicated region
    $region18: #{trainable_boltzman_sampler.1} parent=1 // pred_check
      _
    $region19: #{trainable_boltzman_sampler.1} parent=1 // pred_check_branch
      %36 = sbr.rel (0) target = $region21
    $region20: #{trainable_boltzman_sampler.1} parent=1 // pred_region
      %s38 = ssub.s32 1024, 1024
      %39 = vsyncadd [#allocation7], %s38
      %s40 = sshll.u32 [#allocation6], 4
      %s41 = int_to_ptr.vmem [resolvable:$true] %s40
      %46 = dma.hbm_to_vmem [thread:$0]  %s4, 1024, %s41, [#allocation7], 64, 64, 4
    $region21: #{trainable_boltzman_sampler.1} parent=1 // pred_fallthru
      _
    // Predicated region
    $region22: #{trainable_boltzman_sampler.1} parent=1 // pred_check
      _
    $region23: #{trainable_boltzman_sampler.1} parent=1 // pred_check_branch
      %48 = sbr.rel (0) target = $region25
    $region24: #{trainable_boltzman_sampler.1} parent=1 // pred_region
      _
    $region25: #{trainable_boltzman_sampler.1} parent=1 // pred_fallthru
      _
    // Predicated region
    $region26: #{trainable_boltzman_sampler.1} parent=1 // pred_check
      _
    $region27: #{trainable_boltzman_sampler.1} parent=1 // pred_check_branch
      %50 = sbr.rel (0) target = $region29
    $region28: #{trainable_boltzman_sampler.1} parent=1 // pred_region
      %s52 = ssub.s32 1024, 1024
      %53 = vsyncadd [#allocation7], %s52
      %s54 = sshll.u32 [#allocation8], 4
      %s55 = int_to_ptr.vmem [resolvable:$true] %s54
      %60 = dma.hbm_to_vmem [thread:$0]  %s6, 1024, %s55, [#allocation7], 64, 64, 4
    $region29: #{trainable_boltzman_sampler.1} parent=1 // pred_fallthru
      _
    // Predicated region
    $region30: #{trainable_boltzman_sampler.1} parent=1 // pred_check
      _
    $region31: #{trainable_boltzman_sampler.1} parent=1 // pred_check_branch
      %62 = sbr.rel (0) target = $region33
    $region32: #{trainable_boltzman_sampler.1} parent=1 // pred_region
      _
    $region33: #{trainable_boltzman_sampler.1} parent=1 // pred_fallthru
      _
    // Predicated region
    $region34: #{trainable_boltzman_sampler.1} parent=1 // pred_check
      _
    $region35: #{trainable_boltzman_sampler.1} parent=1 // pred_check_branch
      %64 = sbr.rel (0) target = $region37
    $region36: #{trainable_boltzman_sampler.1} parent=1 // pred_region
      _
    $region37: #{trainable_boltzman_sampler.1} parent=1 // pred_fallthru
      _
    // Predicated region
    $region38: #{trainable_boltzman_sampler.1} parent=1 // pred_check
      _
    $region39: #{trainable_boltzman_sampler.1} parent=1 // pred_check_branch
      %66 = sbr.rel (0) target = $region41
    $region40: #{trainable_boltzman_sampler.1} parent=1 // pred_region
      _
    $region41: #{trainable_boltzman_sampler.1} parent=1 // pred_fallthru
      _
    // Predicated region
    $region42: #{trainable_boltzman_sampler.1} parent=1 // pred_check
      _
    $region43: #{trainable_boltzman_sampler.1} parent=1 // pred_check_branch
      %68 = sbr.rel (0) target = $region45
    $region44: #{trainable_boltzman_sampler.1} parent=1 // pred_region
      %69 = dma.done [#allocation4], 32
    $region45: #{trainable_boltzman_sampler.1} parent=1 // pred_fallthru
      _
    // Predicated region
    $region46: #{trainable_boltzman_sampler.1} parent=1 // pred_check
      _
    $region47: #{trainable_boltzman_sampler.1} parent=1 // pred_check_branch
      %71 = sbr.rel (0) target = $region49
    $region48: #{trainable_boltzman_sampler.1} parent=1 // pred_region
      %72 = dma.done [#allocation7], 1024
    $region49: #{trainable_boltzman_sampler.1} parent=1 // pred_fallthru
      _
    // Predicated region
    $region50: #{trainable_boltzman_sampler.1} parent=1 // pred_check
      _
    $region51: #{trainable_boltzman_sampler.1} parent=1 // pred_check_branch
      %74 = sbr.rel (0) target = $region53
    $region52: #{trainable_boltzman_sampler.1} parent=1 // pred_region
      %75 = dma.done [#allocation7], 1024
    $region53: #{trainable_boltzman_sampler.1} parent=1 // pred_fallthru
      _
    %v77 = vld [vmem:[%s0] sm:$0x1]
    %v78 = vld [vmem:[%s2] sm:$0xf]
    %v79 = vld [vmem:[%s2 + $0x4] sm:$0xf]
    %v80 = vld [vmem:[%s3] sm:$0x1]
    %v82 = vlaneseq
    %v83 = vshrl.u32 %v82, 7
    %v84 = vsub.s32 0, %v83
    %v85 = vrot.slane %v80, %v84
    %v89 = vunpack.c.l.b16 %v78
    %v90 = vunpack.c.l.b16 %v79
    %v91 = vpack.c.b16 %v90, %v89
    %vm93 = vcmask 130048
    %v95 = vsel %vm93, %v77, 0
    %97 = vmatprep.subr.bf16.mxu0 0
    %98 = vmatpush1.bf16.msra.mxu0 0
    %99 = vmatprep.subr.bf16.mxu0 0
    %100 = vmatpush1.bf16.msra.mxu0 0
    %101 = vmatprep.subr.bf16.mxu0 0
    %102 = vmatpush1.bf16.msra.mxu0 0
    %103 = vmatprep.subr.bf16.mxu0 0
    %104 = vmatpush1.bf16.msra.mxu0 0
    %105 = vmatprep.subr.bf16.mxu0 0
    %106 = vmatpush1.bf16.msra.mxu0 0
    %107 = vmatprep.subr.bf16.mxu0 0
    %108 = vmatpush1.bf16.msra.mxu0 0
    %109 = vmatprep.subr.bf16.mxu0 0
    %110 = vmatpush1.bf16.msra.mxu0 0
    %111 = vmatprep.subr.bf16.mxu0 0
    %112 = vmatpush1.bf16.msra.mxu0 %v91
    %113 = vmatprep.subr.bf16.mxu0 0
    %114 = vmatpush2.bf16.msra.mxu0 0
    %115 = vmatprep.subr.bf16.mxu0 0
    %116 = vmatpush2.bf16.msra.mxu0 0
    %117 = vmatprep.subr.bf16.mxu0 0
    %118 = vmatpush2.bf16.msra.mxu0 0
    %119 = vmatprep.subr.bf16.mxu0 0
    %120 = vmatpush2.bf16.msra.mxu0 0
    %121 = vmatprep.subr.bf16.mxu0 0
    %122 = vmatpush2.bf16.msra.mxu0 0
    %123 = vmatprep.subr.bf16.mxu0 0
    %124 = vmatpush2.bf16.msra.mxu0 0
    %125 = vmatprep.subr.bf16.mxu0 0
    %126 = vmatpush2.bf16.msra.mxu0 0
    %127 = vmatprep.subr.bf16.mxu0 0
    %128 = vmatpush2.bf16.msra.mxu0 0
    %129 = vmatprep.mubr.bf16.mxu0 0
    %130 = vmatmul.mubr.bf16.gmra.mxu0 %v95
    %v131 = vpop.f32.mrf.mxu0
    %v132 = vadd.f32 %v85, %v131
    %v133 = vpop.f32.mrf.mxu0
    %v134 = vpop.f32.mrf.mxu0
    %v135 = vpop.f32.mrf.mxu0
    %136 = vdwg.mxu0
    %v137 = vmax.f32 %v132, 0.0
    %v138 = vpack.c.bf16 %v137, %v137
    %v139 = vld [vmem:[#allocation6] sm:$0xf]
    %v140 = vld [vmem:[#allocation6 + $0x4] sm:$0xf]
    %v141 = vld [vmem:[#allocation6 + $0x8] sm:$0xf]
    %v142 = vld [vmem:[#allocation6 + $0xc] sm:$0xf]
    %v143 = vld [vmem:[#allocation6 + $0x10] sm:$0xf]
    %v144 = vld [vmem:[#allocation6 + $0x14] sm:$0xf]
    %v145 = vld [vmem:[#allocation6 + $0x18] sm:$0xf]
    %v146 = vld [vmem:[#allocation6 + $0x1c] sm:$0xf]
    %v147 = vld [vmem:[#allocation6 + $0x20] sm:$0xf]
    %v148 = vld [vmem:[#allocation6 + $0x24] sm:$0xf]
    %v149 = vld [vmem:[#allocation6 + $0x28] sm:$0xf]
    %v150 = vld [vmem:[#allocation6 + $0x2c] sm:$0xf]
    %v151 = vld [vmem:[#allocation6 + $0x30] sm:$0xf]
    %v152 = vld [vmem:[#allocation6 + $0x34] sm:$0xf]
    %v153 = vld [vmem:[#allocation6 + $0x38] sm:$0xf]
    %v154 = vld [vmem:[#allocation6 + $0x3c] sm:$0xf]
    %v155 = vld [vmem:[%s5] sm:$0x1]
    %v157 = vlaneseq
    %v158 = vshrl.u32 %v157, 7
    %v159 = vsub.s32 0, %v158
    %v160 = vrot.slane %v155, %v159
    %v178 = vunpack.c.l.b16 %v139
    %v179 = vunpack.c.l.b16 %v140
    %v180 = vunpack.c.l.b16 %v141
    %v181 = vunpack.c.l.b16 %v142
    %v182 = vunpack.c.l.b16 %v143
    %v183 = vunpack.c.l.b16 %v144
    %v184 = vunpack.c.l.b16 %v145
    %v185 = vunpack.c.l.b16 %v146
    %v186 = vunpack.c.l.b16 %v147
    %v187 = vunpack.c.l.b16 %v148
    %v188 = vunpack.c.l.b16 %v149
    %v189 = vunpack.c.l.b16 %v150
    %v190 = vunpack.c.l.b16 %v151
    %v191 = vunpack.c.l.b16 %v152
    %v192 = vunpack.c.l.b16 %v153
    %v193 = vunpack.c.l.b16 %v154
    %v194 = vpack.c.b16 %v179, %v178
    %v195 = vpack.c.b16 %v181, %v180
    %v196 = vpack.c.b16 %v183, %v182
    %v197 = vpack.c.b16 %v185, %v184
    %v198 = vpack.c.b16 %v187, %v186
    %v199 = vpack.c.b16 %v189, %v188
    %v200 = vpack.c.b16 %v191, %v190
    %v201 = vpack.c.b16 %v193, %v192
    %210 = vmatprep.subr.bf16.mxu0 0
    %211 = vmatpush1.bf16.msra.mxu0 %v201
    %212 = vmatprep.subr.bf16.mxu0 0
    %213 = vmatpush1.bf16.msra.mxu0 %v200
    %214 = vmatprep.subr.bf16.mxu0 0
    %215 = vmatpush1.bf16.msra.mxu0 %v199
    %216 = vmatprep.subr.bf16.mxu0 0
    %217 = vmatpush1.bf16.msra.mxu0 %v198
    %218 = vmatprep.subr.bf16.mxu0 0
    %219 = vmatpush1.bf16.msra.mxu0 %v197
    %220 = vmatprep.subr.bf16.mxu0 0
    %221 = vmatpush1.bf16.msra.mxu0 %v196
    %222 = vmatprep.subr.bf16.mxu0 0
    %223 = vmatpush1.bf16.msra.mxu0 %v195
    %224 = vmatprep.subr.bf16.mxu0 0
    %225 = vmatpush1.bf16.msra.mxu0 %v194
    %226 = vmatprep.subr.bf16.mxu0 0
    %227 = vmatpush2.bf16.msra.mxu0 0
    %228 = vmatprep.subr.bf16.mxu0 0
    %229 = vmatpush2.bf16.msra.mxu0 0
    %230 = vmatprep.subr.bf16.mxu0 0
    %231 = vmatpush2.bf16.msra.mxu0 0
    %232 = vmatprep.subr.bf16.mxu0 0
    %233 = vmatpush2.bf16.msra.mxu0 0
    %234 = vmatprep.subr.bf16.mxu0 0
    %235 = vmatpush2.bf16.msra.mxu0 0
    %236 = vmatprep.subr.bf16.mxu0 0
    %237 = vmatpush2.bf16.msra.mxu0 0
    %238 = vmatprep.subr.bf16.mxu0 0
    %239 = vmatpush2.bf16.msra.mxu0 0
    %240 = vmatprep.subr.bf16.mxu0 0
    %241 = vmatpush2.bf16.msra.mxu0 0
    %242 = vmatprep.mubr.bf16.mxu0 0
    %243 = vmatmul.mubr.bf16.gmra.mxu0 %v138
    %v244 = vpop.f32.mrf.mxu0
    %v245 = vadd.f32 %v160, %v244
    %v246 = vpop.f32.mrf.mxu0
    %v247 = vpop.f32.mrf.mxu0
    %v248 = vpop.f32.mrf.mxu0
    %249 = vdwg.mxu0
    %v250 = vmax.f32 %v245, 0.0
    %v251 = vpack.c.bf16 %v250, %v250
    %v252 = vld [vmem:[#allocation8] sm:$0xf]
    %v253 = vld [vmem:[#allocation8 + $0x4] sm:$0xf]
    %v254 = vld [vmem:[#allocation8 + $0x8] sm:$0xf]
    %v255 = vld [vmem:[#allocation8 + $0xc] sm:$0xf]
    %v256 = vld [vmem:[#allocation8 + $0x10] sm:$0xf]
    %v257 = vld [vmem:[#allocation8 + $0x14] sm:$0xf]
    %v258 = vld [vmem:[#allocation8 + $0x18] sm:$0xf]
    %v259 = vld [vmem:[#allocation8 + $0x1c] sm:$0xf]
    %v260 = vld [vmem:[#allocation8 + $0x20] sm:$0xf]
    %v261 = vld [vmem:[#allocation8 + $0x24] sm:$0xf]
    %v262 = vld [vmem:[#allocation8 + $0x28] sm:$0xf]
    %v263 = vld [vmem:[#allocation8 + $0x2c] sm:$0xf]
    %v264 = vld [vmem:[#allocation8 + $0x30] sm:$0xf]
    %v265 = vld [vmem:[#allocation8 + $0x34] sm:$0xf]
    %v266 = vld [vmem:[#allocation8 + $0x38] sm:$0xf]
    %v267 = vld [vmem:[#allocation8 + $0x3c] sm:$0xf]
    %v268 = vld [vmem:[%s7] sm:$0x1]
    %v270 = vlaneseq
    %v271 = vshrl.u32 %v270, 7
    %v272 = vsub.s32 0, %v271
    %v273 = vrot.slane %v268, %v272
    %v291 = vunpack.c.l.b16 %v252
    %v292 = vunpack.c.l.b16 %v253
    %v293 = vunpack.c.l.b16 %v254
    %v294 = vunpack.c.l.b16 %v255
    %v295 = vunpack.c.l.b16 %v256
    %v296 = vunpack.c.l.b16 %v257
    %v297 = vunpack.c.l.b16 %v258
    %v298 = vunpack.c.l.b16 %v259
    %v299 = vunpack.c.l.b16 %v260
    %v300 = vunpack.c.l.b16 %v261
    %v301 = vunpack.c.l.b16 %v262
    %v302 = vunpack.c.l.b16 %v263
    %v303 = vunpack.c.l.b16 %v264
    %v304 = vunpack.c.l.b16 %v265
    %v305 = vunpack.c.l.b16 %v266
    %v306 = vunpack.c.l.b16 %v267
    %v307 = vpack.c.b16 %v292, %v291
    %v308 = vpack.c.b16 %v294, %v293
    %v309 = vpack.c.b16 %v296, %v295
    %v310 = vpack.c.b16 %v298, %v297
    %v311 = vpack.c.b16 %v300, %v299
    %v312 = vpack.c.b16 %v302, %v301
    %v313 = vpack.c.b16 %v304, %v303
    %v314 = vpack.c.b16 %v306, %v305
    %323 = vmatprep.subr.bf16.mxu0 0
    %324 = vmatpush1.bf16.msra.mxu0 %v314
    %325 = vmatprep.subr.bf16.mxu0 0
    %326 = vmatpush1.bf16.msra.mxu0 %v313
    %327 = vmatprep.subr.bf16.mxu0 0
    %328 = vmatpush1.bf16.msra.mxu0 %v312
    %329 = vmatprep.subr.bf16.mxu0 0
    %330 = vmatpush1.bf16.msra.mxu0 %v311
    %331 = vmatprep.subr.bf16.mxu0 0
    %332 = vmatpush1.bf16.msra.mxu0 %v310
    %333 = vmatprep.subr.bf16.mxu0 0
    %334 = vmatpush1.bf16.msra.mxu0 %v309
    %335 = vmatprep.subr.bf16.mxu0 0
    %336 = vmatpush1.bf16.msra.mxu0 %v308
    %337 = vmatprep.subr.bf16.mxu0 0
    %338 = vmatpush1.bf16.msra.mxu0 %v307
    %339 = vmatprep.subr.bf16.mxu0 0
    %340 = vmatpush2.bf16.msra.mxu0 0
    %341 = vmatprep.subr.bf16.mxu0 0
    %342 = vmatpush2.bf16.msra.mxu0 0
    %343 = vmatprep.subr.bf16.mxu0 0
    %344 = vmatpush2.bf16.msra.mxu0 0
    %345 = vmatprep.subr.bf16.mxu0 0
    %346 = vmatpush2.bf16.msra.mxu0 0
    %347 = vmatprep.subr.bf16.mxu0 0
    %348 = vmatpush2.bf16.msra.mxu0 0
    %349 = vmatprep.subr.bf16.mxu0 0
    %350 = vmatpush2.bf16.msra.mxu0 0
    %351 = vmatprep.subr.bf16.mxu0 0
    %352 = vmatpush2.bf16.msra.mxu0 0
    %353 = vmatprep.subr.bf16.mxu0 0
    %354 = vmatpush2.bf16.msra.mxu0 0
    %355 = vmatprep.mubr.bf16.mxu0 0
    %356 = vmatmul.mubr.bf16.gmra.mxu0 %v251
    %v357 = vpop.f32.mrf.mxu0
    %v358 = vadd.f32 %v273, %v357
    %v359 = vpop.f32.mrf.mxu0
    %v360 = vpop.f32.mrf.mxu0
    %v361 = vpop.f32.mrf.mxu0
    %362 = vdwg.mxu0
    %v363 = vmax.f32 %v358, 0.0
    %v364 = vld [vmem:[%s8] sm:$0x1]
    %v366 = vlaneseq
    %v367 = vshrl.u32 %v366, 7
    %v368 = vsub.s32 0, %v367
    %v369 = vrot.slane %v364, %v368
    %v371 = vmul.f32 %v363, %v369
    %vm372 = vcmask 1041408
    %v373 = vsel %vm372, %v371, 0.0
    %374 = vadd.xlane.f32.xlu0 %v373
    %v375 = vpop.xlane.xlu0 %374
    %s376 = sld [smem:[#allocation2]]
    %v377 = vstv %s376
    %v378 = vadd.f32 %v375, %v377
    %v379 = vrcp.pop %v378
    %v380 = vld [vmem:[#allocation3] sm:$0x3]
    %v381 = vmul.f32 %v380, %v379
    %vm382 = vcmask 58368
    %v383 = vsel %vm382, %v381, -inf
    %384 = vmax.xlane.f32.xlu0 %v383
    %v385 = vpop.xlane.xlu0 %384
    %v386 = vsub.f32 %v381, %v385
    %v387 = vmul.f32 %v386, 1.442695
    %v388 = vpow.pop %v387
    %v389 = vsel %vm382, %v388, 0.0
    %390 = vadd.xlane.f32.xlu0 %v389
    %v391 = vpop.xlane.xlu0 %390
    %v392 = vrcp.pop %v391
    %v393 = vmul.f32 %v388, %v392
    %394 = vst.msk [vmem:[#allocation9] sm:$0x3] %vm382, %v393
    // Predicated region
    $region54: #{trainable_boltzman_sampler.1} parent=1 // pred_check
      _
    $region55: #{trainable_boltzman_sampler.1} parent=1 // pred_check_branch
      %396 = sbr.rel (0) target = $region57
    $region56: #{trainable_boltzman_sampler.1} parent=1 // pred_region
      %s398 = ssub.s32 32, 32
      %399 = vsyncadd [#allocation5], %s398
      %s401 = sshll.u32 [#allocation9], 4
      %s402 = int_to_ptr.vmem [resolvable:$true] %s401
      %404 = dma.vmem_to_hbm [thread:$0]  %s402, 32, %s10, [#allocation5]
    $region57: #{trainable_boltzman_sampler.1} parent=1 // pred_fallthru
      _
    // Predicated region
    $region58: #{trainable_boltzman_sampler.1} parent=1 // pred_check
      _
    $region59: #{trainable_boltzman_sampler.1} parent=1 // pred_check_branch
      %406 = sbr.rel (0) target = $region61
    $region60: #{trainable_boltzman_sampler.1} parent=1 // pred_region
      %407 = dma.done [#allocation5], 32
    $region61: #{trainable_boltzman_sampler.1} parent=1 // pred_fallthru
      _
    %408 = vsyncpa [#allocation4], 1
    %409 = vsyncpa [#allocation7], 1
    %410 = vsyncpa [#allocation5], 1

</llo_original>
